<compile_context>
chip_gen: v5e
topology: v5e:2x2
jax: 0.10.0
libtpu: 0.0.40
codegen_flags: <defaults>
</compile_context>

<pallas_src>
from functools import partial

import jax
import jax.numpy as jnp
from jax.experimental import pallas as pl
from jax.experimental.pallas import tpu as pltpu


def _round_up(x, m):
    return (x + m - 1) // m * m


def forked_kernel(xa_ref, xb_ref, wa_ref, wb_ref, wc_ref, bc_ref, out_ref, *, feat):
    """One batch tile of the fused ForkedModel forward.

    xa_ref : (D_a+1, TILE_B)  branch-a input^T with a trailing ones row   (bf16)
    xb_ref : (D_b+1, TILE_B)  branch-b input^T with a trailing ones row   (bf16)
    wa_ref : (F, D_a+1)       [Wa^T | ba] resident                        (bf16)
    wb_ref : (F, D_b+1)       [Wb^T | bb] resident                        (bf16)
    wc_ref : (2F, 1)          classifier weight column, resident          (f32)
    bc_ref : (1,)             classifier bias scalar                      (f32, SMEM)
    out_ref: (1, TILE_B)      logits, lane-dense output row               (f32)
    """
    # Branch Linears on the MXU; bias already folded in via the ones row.
    fa = jnp.dot(wa_ref[...], xa_ref[...], preferred_element_type=jnp.float32)  # (F, TB)
    fb = jnp.dot(wb_ref[...], xb_ref[...], preferred_element_type=jnp.float32)  # (F, TB)
    fa = jnp.maximum(fa, 0.0)                                                   # ReLU (VPU)
    fb = jnp.maximum(fb, 0.0)
    # classifier(cat([fa; fb], dim=feature)) decomposed per branch:
    # VPU multiply + sublane (axis=0) reduction -> lane-dense (1, TILE_B) row.
    logits = (jnp.sum(fa * wc_ref[0:feat, :], axis=0, keepdims=True)
              + jnp.sum(fb * wc_ref[feat:2 * feat, :], axis=0, keepdims=True))
    out_ref[...] = logits + bc_ref[0]                                           # unmasked vst


def _choose_tile_b(B, tile_b=None, tile_b_max=2048):
    """Lane-dense batch tile: big enough to amortize ~0.35us/step and fill the
    256-wide MXU (v6e/v7x), small enough to give >=2 grid steps for megacore."""
    b128 = _round_up(max(B, 1), 128)
    if tile_b is not None:
        return min(max(128, _round_up(tile_b, 128)), max(b128, 128))
    if b128 <= 256:
        return b128                      # tiny batch: one step, overhead-bound anyway
    half = _round_up((b128 + 1) // 2, 128)
    return max(256, min(tile_b_max, half))


def _prep_input(x, b_pad, cdt):
    """(B, D) -> (D+1, b_pad): bf16 cast, transpose (batch on lanes), ones row
    for the folded bias, zero-pad batch. XLA fuses this layout plumbing; if the
    producer can hand over (D, B)-layout activations this prep disappears."""
    B = x.shape[0]
    xt = x.astype(cdt).T                                   # (D, B)
    xt = jnp.concatenate([xt, jnp.ones((1, B), cdt)], axis=0)  # bias row
    if b_pad != B:
        xt = jnp.pad(xt, ((0, 0), (0, b_pad - B)))
    return xt


def forked_model_forward(x_dict, params, *, tile_b=None, use_bf16=True):
    """Pallas equivalent of ForkedModel.forward (pretrained=True)."""
    keys = sorted(x_dict.keys())            # matches OrderedDict(sorted(...)) branch order
    assert keys == ["a", "b"]
    xa, xb = x_dict["a"], x_dict["b"]
    wa, ba = params["wa"], params["ba"]
    wb, bb = params["wb"], params["bb"]
    wc, bc = params["wc"], params["bc"]

    d_a, feat = wa.shape
    d_b = wb.shape[0]
    two_f = 2 * feat
    B = xa.shape[0]

    cdt = jnp.bfloat16 if use_bf16 else jnp.float32    # matmul operand dtype (f32 accumulate)

    tb = _choose_tile_b(B, tile_b)
    b_pad = _round_up(B, tb)
    grid = (b_pad // tb,)

    # ---- host-side packing (minimal layout plumbing) --------------------------
    xa_t = _prep_input(xa, b_pad, cdt)                              # (d_a+1, b_pad)
    xb_t = _prep_input(xb, b_pad, cdt)                              # (d_b+1, b_pad)
    # per-branch weights with the bias folded in as the last K column
    wa_aug = jnp.concatenate(
        [wa.T.astype(cdt), ba.reshape(feat, 1).astype(cdt)], axis=1)   # (feat, d_a+1)
    wb_aug = jnp.concatenate(
        [wb.T.astype(cdt), bb.reshape(feat, 1).astype(cdt)], axis=1)   # (feat, d_b+1)
    wc_col = wc.reshape(two_f, 1).astype(jnp.float32)
    bc_s = bc.reshape(1).astype(jnp.float32)                        # SMEM scalar

    flops = (2 * feat * ((d_a + 1) + (d_b + 1)) * b_pad             # two MXU matmuls
             + (4 * feat + 2) * b_pad)                              # ReLU + wc-mul + reduce
    itemsize = jnp.dtype(cdt).itemsize
    bytes_accessed = ((xa_t.size + xb_t.size + wa_aug.size + wb_aug.size) * itemsize
                      + (wc_col.size + bc_s.size + b_pad) * 4)

    out = pl.pallas_call(
        partial(forked_kernel, feat=feat),
        out_shape=jax.ShapeDtypeStruct((1, b_pad), jnp.float32),
        grid=grid,
        in_specs=[
            pl.BlockSpec((d_a + 1, tb), lambda i: (0, i)),          # branch-a acts: pipelined
            pl.BlockSpec((d_b + 1, tb), lambda i: (0, i)),          # branch-b acts: pipelined
            pl.BlockSpec((feat, d_a + 1), lambda i: (0, 0)),        # [Wa^T|ba]: resident
            pl.BlockSpec((feat, d_b + 1), lambda i: (0, 0)),        # [Wb^T|bb]: resident
            pl.BlockSpec((two_f, 1), lambda i: (0, 0)),             # classifier col: resident
            pl.BlockSpec(memory_space=pltpu.MemorySpace.SMEM),      # classifier bias scalar
        ],
        out_specs=pl.BlockSpec((1, tb), lambda i: (0, i)),          # lane-dense logits row
        compiler_params=pltpu.CompilerParams(
            dimension_semantics=("parallel",),
            vmem_limit_bytes=32 * 1024 * 1024,
        ),
        cost_estimate=pl.CostEstimate(
            flops=flops, transcendentals=0, bytes_accessed=bytes_accessed),
    )(xa_t, xb_t, wa_aug, wb_aug, wc_col, bc_s)

    # classifier(features).squeeze(); slice off padded batch lanes immediately.
    return jnp.squeeze(out[0, :B])


def init_params(key, d_in_a, d_in_b, feat):
    ks = jax.random.split(key, 6)
    scale = 0.05
    return {
        "wa": scale * jax.random.normal(ks[0], (d_in_a, feat), jnp.float32),
        "ba": scale * jax.random.normal(ks[1], (1, feat), jnp.float32),
        "wb": scale * jax.random.normal(ks[2], (d_in_b, feat), jnp.float32),
        "bb": scale * jax.random.normal(ks[3], (1, feat), jnp.float32),
        "wc": scale * jax.random.normal(ks[4], (2 * feat, 1), jnp.float32),
        "bc": scale * jax.random.normal(ks[5], (1, 1), jnp.float32),
    }


def _reference(x, params):
    # pure-JAX f32 reference mirroring the PyTorch forward
    fa = jnp.maximum(x["a"] @ params["wa"] + params["ba"], 0.0)
    fb = jnp.maximum(x["b"] @ params["wb"] + params["bb"], 0.0)
    return jnp.squeeze(jnp.concatenate([fa, fb], axis=1) @ params["wc"] + params["bc"])


if __name__ == "__main__":
    D_A, D_B, FEAT = 32, 32, 128

    key = jax.random.PRNGKey(0)
    k_xa, k_xb, k_p = jax.random.split(key, 3)
    params = init_params(k_p, D_A, D_B, FEAT)

    # small case (single grid step)
    B = 8
    x = {
        "a": jax.random.normal(k_xa, (B, D_A), jnp.float32),
        "b": jax.random.normal(k_xb, (B, D_B), jnp.float32),
    }
    out = forked_model_forward(x, params)
    jax.block_until_ready(out)
    ref = _reference(x, params)
    assert out.shape == (B,)
    # bf16 matmul operands (f32 accumulation) -> loosened tolerance vs f32 reference
    assert jnp.allclose(out, ref, atol=3e-2, rtol=3e-2), float(jnp.max(jnp.abs(out - ref)))

    # slightly larger case exercising multi-step grid + batch padding
    B2 = 384
    x2 = {
        "a": jax.random.normal(k_xa, (B2, D_A), jnp.float32),
        "b": jax.random.normal(k_xb, (B2, D_B), jnp.float32),
    }
    out2 = forked_model_forward(x2, params)
    jax.block_until_ready(out2)
    ref2 = _reference(x2, params)
    assert out2.shape == (B2,)
    assert jnp.allclose(out2, ref2, atol=3e-2, rtol=3e-2), float(jnp.max(jnp.abs(out2 - ref2)))

    print("KERNEL_OK")
</pallas_src>

<mosaic_0001>
module attributes {stable_mosaic.version = 11 : i64} {
  func.func @forked_kernel(%arg0: i32, %arg1: memref<33x128xbf16, #tpu.memory_space<vmem>>, %arg2: memref<33x128xbf16, #tpu.memory_space<vmem>>, %arg3: memref<128x33xbf16, #tpu.memory_space<vmem>>, %arg4: memref<128x33xbf16, #tpu.memory_space<vmem>>, %arg5: memref<256x1xf32, #tpu.memory_space<vmem>>, %arg6: memref<1xf32, #tpu.memory_space<smem>>, %arg7: memref<1x128xf32, #tpu.memory_space<vmem>>) attributes {dimension_semantics = [#tpu.dimension_semantics<parallel>], iteration_bounds = array<i64: 1>, scalar_prefetch = 0 : i64, scratch_operands = 0 : i64, tpu.core_type = #tpu.core_type<tc>, window_params = [{transform_indices = @transform_0, window_bounds = array<i64: 33, 128>}, {transform_indices = @transform_1, window_bounds = array<i64: 33, 128>}, {pipeline_mode = #tpu.pipeline_mode<synchronous>, transform_indices = @transform_2, window_bounds = array<i64: 128, 33>}, {pipeline_mode = #tpu.pipeline_mode<synchronous>, transform_indices = @transform_3, window_bounds = array<i64: 128, 33>}, {pipeline_mode = #tpu.pipeline_mode<synchronous>, transform_indices = @transform_4, window_bounds = array<i64: 256, 1>}, {transform_indices = @transform_5, window_bounds = array<i64: 1>}, {transform_indices = @transform_6, window_bounds = array<i64: 1, 128>}]} {
    %c0 = arith.constant 0 : index
    %c0_0 = arith.constant 0 : index
    %0 = vector.load %arg3[%c0, %c0_0] : memref<128x33xbf16, #tpu.memory_space<vmem>>, vector<128x33xbf16>
    %c0_1 = arith.constant 0 : index
    %c0_2 = arith.constant 0 : index
    %1 = vector.load %arg1[%c0_1, %c0_2] : memref<33x128xbf16, #tpu.memory_space<vmem>>, vector<33x128xbf16>
    %cst = arith.constant dense<0.000000e+00> : vector<128x128xf32>
    %2 = tpu.matmul %0, %1, %cst {dimension_numbers = #tpu.dot_dimension_numbers<[1], [0], [0], [1], [0, 0, 1, 1], [], []>} : vector<128x33xbf16>, vector<33x128xbf16>, vector<128x128xf32> -> vector<128x128xf32>
    %c0_3 = arith.constant 0 : index
    %c0_4 = arith.constant 0 : index
    %3 = vector.load %arg4[%c0_3, %c0_4] : memref<128x33xbf16, #tpu.memory_space<vmem>>, vector<128x33xbf16>
    %c0_5 = arith.constant 0 : index
    %c0_6 = arith.constant 0 : index
    %4 = vector.load %arg2[%c0_5, %c0_6] : memref<33x128xbf16, #tpu.memory_space<vmem>>, vector<33x128xbf16>
    %cst_7 = arith.constant dense<0.000000e+00> : vector<128x128xf32>
    %5 = tpu.matmul %3, %4, %cst_7 {dimension_numbers = #tpu.dot_dimension_numbers<[1], [0], [0], [1], [0, 0, 1, 1], [], []>} : vector<128x33xbf16>, vector<33x128xbf16>, vector<128x128xf32> -> vector<128x128xf32>
    %cst_8 = arith.constant 0.000000e+00 : f32
    %6 = vector.broadcast %cst_8 : f32 to vector<128x128xf32>
    %7 = arith.maximumf %2, %6 : vector<128x128xf32>
    %cst_9 = arith.constant 0.000000e+00 : f32
    %8 = vector.broadcast %cst_9 : f32 to vector<128x128xf32>
    %9 = arith.maximumf %5, %8 : vector<128x128xf32>
    %c0_10 = arith.constant 0 : index
    %c0_11 = arith.constant 0 : index
    %10 = vector.load %arg5[%c0_10, %c0_11] : memref<256x1xf32, #tpu.memory_space<vmem>>, vector<128x1xf32>
    %11 = vector.broadcast %10 : vector<128x1xf32> to vector<128x128xf32>
    %12 = arith.mulf %7, %11 : vector<128x128xf32>
    %cst_12 = arith.constant dense<0.000000e+00> : vector<128xf32>
    %13 = vector.multi_reduction <add>, %12, %cst_12 [0] : vector<128x128xf32> to vector<128xf32>
    %14 = vector.shape_cast %13 : vector<128xf32> to vector<1x128xf32>
    %c128 = arith.constant 128 : index
    %c0_13 = arith.constant 0 : index
    %15 = vector.load %arg5[%c128, %c0_13] : memref<256x1xf32, #tpu.memory_space<vmem>>, vector<128x1xf32>
    %16 = vector.broadcast %15 : vector<128x1xf32> to vector<128x128xf32>
    %17 = arith.mulf %9, %16 : vector<128x128xf32>
    %cst_14 = arith.constant dense<0.000000e+00> : vector<128xf32>
    %18 = vector.multi_reduction <add>, %17, %cst_14 [0] : vector<128x128xf32> to vector<128xf32>
    %19 = vector.shape_cast %18 : vector<128xf32> to vector<1x128xf32>
    %20 = arith.addf %14, %19 : vector<1x128xf32>
    %c0_15 = arith.constant 0 : index
    %21 = memref.load %arg6[%c0_15] : memref<1xf32, #tpu.memory_space<smem>>
    %22 = vector.broadcast %21 : f32 to vector<1x128xf32>
    %23 = arith.addf %20, %22 : vector<1x128xf32>
    %c0_16 = arith.constant 0 : index
    %c0_17 = arith.constant 0 : index
    %24 = vector.load %arg7[%c0_16, %c0_17] : memref<1x128xf32, #tpu.memory_space<vmem>>, vector<1x128xf32>
    tpu.vector_store %arg7[%c0_16, %c0_17], %23 {strides = array<i32>} : memref<1x128xf32, #tpu.memory_space<vmem>>, vector<1x128xf32>,
    return
  }
  func.func @transform_0(%arg0: i32) -> (i32, i32) {
    %c0_i32 = arith.constant 0 : i32
    %c0_i32_0 = arith.constant 0 : i32
    return %c0_i32, %arg0 : i32, i32
  }
  func.func @transform_1(%arg0: i32) -> (i32, i32) {
    %c0_i32 = arith.constant 0 : i32
    %c0_i32_0 = arith.constant 0 : i32
    return %c0_i32, %arg0 : i32, i32
  }
  func.func @transform_2(%arg0: i32) -> (i32, i32) {
    %c0_i32 = arith.constant 0 : i32
    %c0_i32_0 = arith.constant 0 : i32
    %c0_i32_1 = arith.constant 0 : i32
    return %c0_i32, %c0_i32_0 : i32, i32
  }
  func.func @transform_3(%arg0: i32) -> (i32, i32) {
    %c0_i32 = arith.constant 0 : i32
    %c0_i32_0 = arith.constant 0 : i32
    %c0_i32_1 = arith.constant 0 : i32
    return %c0_i32, %c0_i32_0 : i32, i32
  }
  func.func @transform_4(%arg0: i32) -> (i32, i32) {
    %c0_i32 = arith.constant 0 : i32
    %c0_i32_0 = arith.constant 0 : i32
    %c0_i32_1 = arith.constant 0 : i32
    return %c0_i32, %c0_i32_0 : i32, i32
  }
  func.func @transform_5(%arg0: i32) -> i32 {
    %c0_i32 = arith.constant 0 : i32
    %c0_i32_0 = arith.constant 0 : i32
    return %c0_i32 : i32
  }
  func.func @transform_6(%arg0: i32) -> (i32, i32) {
    %c0_i32 = arith.constant 0 : i32
    %c0_i32_0 = arith.constant 0 : i32
    return %c0_i32, %arg0 : i32, i32
  }
}

</mosaic_0001>

<llo_original>
// kernel: tpu_custom_call.1
$region0: #{tpu_custom_call.1}
  #allocation0 [shape = 'u32[]', space=smem, size = 0x4, offset = 0x4, fixed_abs, tag = 'smem constant byte address 0x4 - core index']
  #allocation1 [shape = 'u32[72,128]{1,0:T(1,128)}', space=vmem, size = 0x9000, scoped, tag = 'internal scratch']
  #allocation2 [shape = 'f32[1]{0:T(128)S(6)}', space=smem, size = 0x200, scoped, tag = 'scoped memory for tpu_custom_call.1']
  %s0 = inlined_call_operand.vmem [shape: bf16[33,128], index: 0, kind: input, shape index: {}]
  %s1 = inlined_call_operand.vmem [shape: bf16[33,128], index: 1, kind: input, shape index: {}]
  %s2 = inlined_call_operand.vmem [shape: bf16[128,33], index: 2, kind: input, shape index: {}]
  %s3 = inlined_call_operand.vmem [shape: bf16[128,33], index: 3, kind: input, shape index: {}]
  %s4 = inlined_call_operand.vmem [shape: f32[256,1], index: 4, kind: input, shape index: {}]
  %s5 = inlined_call_operand.<no memory space> [shape: f32[1], index: 5, kind: input, shape index: {}]
  %s6 = inlined_call_operand.hbm [shape: f32[1,128], index: 6, kind: output, shape index: {}]
  %s7 = sld [smem:[#allocation0]]
  $region34: #{tpu_custom_call.1} parent=0
    _
  %s9 = ssub.s32 1, %s7
  %s10 = scalar_select 0, %s9, %s7
  %11 = sst [smem:[#allocation2]] %s5
  $region1: #{tpu_custom_call.1} parent=0
    #allocation3 [shape = 'u8[512]{0}', space=vmem, size = 0x400, scoped, tag = 'output window, operand 0, single buffered']
    #allocation4 [shape = 's32[1]{0}', space=sflag, size = 0x4, scoped, tag = 'scoped memory for tpu_custom_call.1']
    %12 = vsyncpa [#allocation4], 0
    // Predicated region
    $region2: #{tpu_custom_call.1} parent=1 // pred_check
      _
    $region3: #{tpu_custom_call.1} parent=1 // pred_check_branch
      %14 = sbr.rel (0) target = $region5
    $region4: #{tpu_custom_call.1} parent=1 // pred_region
      _
    $region5: #{tpu_custom_call.1} parent=1 // pred_fallthru
      _
    // Predicated region
    $region6: #{tpu_custom_call.1} parent=1 // pred_check
      _
    $region7: #{tpu_custom_call.1} parent=1 // pred_check_branch
      %16 = sbr.rel (0) target = $region9
    $region8: #{tpu_custom_call.1} parent=1 // pred_region
      _
    $region9: #{tpu_custom_call.1} parent=1 // pred_fallthru
      _
    // Predicated region
    $region10: #{tpu_custom_call.1} parent=1 // pred_check
      _
    $region11: #{tpu_custom_call.1} parent=1 // pred_check_branch
      %18 = sbr.rel (0) target = $region13
    $region12: #{tpu_custom_call.1} parent=1 // pred_region
      _
    $region13: #{tpu_custom_call.1} parent=1 // pred_fallthru
      _
    // Predicated region
    $region14: #{tpu_custom_call.1} parent=1 // pred_check
      _
    $region15: #{tpu_custom_call.1} parent=1 // pred_check_branch
      %20 = sbr.rel (0) target = $region17
    $region16: #{tpu_custom_call.1} parent=1 // pred_region
      _
    $region17: #{tpu_custom_call.1} parent=1 // pred_fallthru
      _
    // Predicated region
    $region18: #{tpu_custom_call.1} parent=1 // pred_check
      _
    $region19: #{tpu_custom_call.1} parent=1 // pred_check_branch
      %22 = sbr.rel (0) target = $region21
    $region20: #{tpu_custom_call.1} parent=1 // pred_region
      _
    $region21: #{tpu_custom_call.1} parent=1 // pred_fallthru
      _
    // Predicated region
    $region22: #{tpu_custom_call.1} parent=1 // pred_check
      _
    $region23: #{tpu_custom_call.1} parent=1 // pred_check_branch
      %24 = sbr.rel (0) target = $region25
    $region24: #{tpu_custom_call.1} parent=1 // pred_region
      _
    $region25: #{tpu_custom_call.1} parent=1 // pred_fallthru
      _
    %v26 = vld [vmem:[%s2] sm:$0xf]
    %v27 = vld [vmem:[%s2 + $0x4] sm:$0xf]
    %v28 = vld [vmem:[%s2 + $0x8] sm:$0xf]
    %v29 = vld [vmem:[%s2 + $0xc] sm:$0xf]
    %v30 = vld [vmem:[%s2 + $0x10] sm:$0xf]
    %v31 = vld [vmem:[%s2 + $0x14] sm:$0xf]
    %v32 = vld [vmem:[%s2 + $0x18] sm:$0xf]
    %v33 = vld [vmem:[%s2 + $0x1c] sm:$0xf]
    %v34 = vld [vmem:[%s2 + $0x20] sm:$0xf]
    %v35 = vld [vmem:[%s2 + $0x24] sm:$0xf]
    %v36 = vld [vmem:[%s2 + $0x28] sm:$0xf]
    %v37 = vld [vmem:[%s2 + $0x2c] sm:$0xf]
    %v38 = vld [vmem:[%s2 + $0x30] sm:$0xf]
    %v39 = vld [vmem:[%s2 + $0x34] sm:$0xf]
    %v40 = vld [vmem:[%s2 + $0x38] sm:$0xf]
    %v41 = vld [vmem:[%s2 + $0x3c] sm:$0xf]
    %v42 = vld [vmem:[%s0] sm:$0xf]
    %v43 = vld [vmem:[%s0 + $0x4] sm:$0xf]
    %v44 = vld [vmem:[%s0 + $0x8] sm:$0xf]
    %v45 = vld [vmem:[%s0 + $0xc] sm:$0xf]
    %v46 = vld [vmem:[%s0 + $0x10] sm:$0x1]
    %v63 = vunpack.c.l.b16 %v26
    %v64 = vunpack.c.l.b16 %v27
    %v65 = vunpack.c.l.b16 %v28
    %v66 = vunpack.c.l.b16 %v29
    %v67 = vunpack.c.l.b16 %v30
    %v68 = vunpack.c.l.b16 %v31
    %v69 = vunpack.c.l.b16 %v32
    %v70 = vunpack.c.l.b16 %v33
    %v71 = vunpack.c.l.b16 %v34
    %v72 = vunpack.c.l.b16 %v35
    %v73 = vunpack.c.l.b16 %v36
    %v74 = vunpack.c.l.b16 %v37
    %v75 = vunpack.c.l.b16 %v38
    %v76 = vunpack.c.l.b16 %v39
    %v77 = vunpack.c.l.b16 %v40
    %v78 = vunpack.c.l.b16 %v41
    %v79 = vpack.c.b16 %v64, %v63
    %v80 = vpack.c.b16 %v66, %v65
    %v81 = vpack.c.b16 %v68, %v67
    %v82 = vpack.c.b16 %v70, %v69
    %v83 = vpack.c.b16 %v72, %v71
    %v84 = vpack.c.b16 %v74, %v73
    %v85 = vpack.c.b16 %v76, %v75
    %v86 = vpack.c.b16 %v78, %v77
    %v92 = vunpack.c.l.b16 %v42
    %v93 = vunpack.c.l.b16 %v43
    %v94 = vunpack.c.l.b16 %v44
    %v95 = vunpack.c.l.b16 %v45
    %v96 = vunpack.c.l.b16 %v46
    %v97 = vpack.c.b16 %v93, %v92
    %v98 = vpack.c.b16 %v95, %v94
    %v99 = vpack.c.b16 %v96, %v96
    %vm102 = vcmask 269312
    %v104 = vsel %vm102, %v79, 0
    %v107 = vsel %vm102, %v80, 0
    %v110 = vsel %vm102, %v81, 0
    %v113 = vsel %vm102, %v82, 0
    %v116 = vsel %vm102, %v83, 0
    %v119 = vsel %vm102, %v84, 0
    %v122 = vsel %vm102, %v85, 0
    %v125 = vsel %vm102, %v86, 0
    %vm127 = vcmask 1040384
    %v128 = vsel 0, 4294967295, 65535
    %v129 = vsel %vm127, %v128, 0
    %v131 = vand.u32 %v99, %v129
    %133 = vmatpush.bf16.msra.mxu0 0
    %134 = vmatpush.bf16.msra.mxu0 0
    %135 = vmatpush.bf16.msra.mxu0 0
    %136 = vmatpush.bf16.msra.mxu0 0
    %137 = vmatpush.bf16.msra.mxu0 0
    %138 = vmatpush.bf16.msra.mxu0 %v131
    %139 = vmatpush.bf16.msra.mxu0 %v98
    %140 = vmatpush.bf16.msra.mxu0 %v97
    %141 = vmatmul.bf16.gmra.mxu0 %v104
    %v142 = vpop.f32.mrf.mxu0
    %v143 = vadd.f32 0.0, %v142
    %v144 = vpop.f32.mrf.mxu0
    %v145 = vadd.f32 0.0, %v144
    %146 = vmatmul.bf16.gmra.mxu0 %v107
    %v147 = vpop.f32.mrf.mxu0
    %v148 = vadd.f32 0.0, %v147
    %v149 = vpop.f32.mrf.mxu0
    %v150 = vadd.f32 0.0, %v149
    %151 = vmatmul.bf16.gmra.mxu0 %v110
    %v152 = vpop.f32.mrf.mxu0
    %v153 = vadd.f32 0.0, %v152
    %v154 = vpop.f32.mrf.mxu0
    %v155 = vadd.f32 0.0, %v154
    %156 = vmatmul.bf16.gmra.mxu0 %v113
    %v157 = vpop.f32.mrf.mxu0
    %v158 = vadd.f32 0.0, %v157
    %v159 = vpop.f32.mrf.mxu0
    %v160 = vadd.f32 0.0, %v159
    %161 = vmatmul.bf16.gmra.mxu0 %v116
    %v162 = vpop.f32.mrf.mxu0
    %v163 = vadd.f32 0.0, %v162
    %v164 = vpop.f32.mrf.mxu0
    %v165 = vadd.f32 0.0, %v164
    %166 = vmatmul.bf16.gmra.mxu0 %v119
    %v167 = vpop.f32.mrf.mxu0
    %v168 = vadd.f32 0.0, %v167
    %v169 = vpop.f32.mrf.mxu0
    %v170 = vadd.f32 0.0, %v169
    %171 = vmatmul.bf16.gmra.mxu0 %v122
    %v172 = vpop.f32.mrf.mxu0
    %v173 = vadd.f32 0.0, %v172
    %v174 = vpop.f32.mrf.mxu0
    %v175 = vadd.f32 0.0, %v174
    %176 = vmatmul.bf16.gmra.mxu0 %v125
    %v177 = vpop.f32.mrf.mxu0
    %v178 = vadd.f32 0.0, %v177
    %v179 = vpop.f32.mrf.mxu0
    %v180 = vadd.f32 0.0, %v179
    %181 = vdwg.mxu0
    %v182 = vld [vmem:[%s3] sm:$0xf]
    %v183 = vld [vmem:[%s3 + $0x4] sm:$0xf]
    %v184 = vld [vmem:[%s3 + $0x8] sm:$0xf]
    %v185 = vld [vmem:[%s3 + $0xc] sm:$0xf]
    %v186 = vld [vmem:[%s3 + $0x10] sm:$0xf]
    %v187 = vld [vmem:[%s3 + $0x14] sm:$0xf]
    %v188 = vld [vmem:[%s3 + $0x18] sm:$0xf]
    %v189 = vld [vmem:[%s3 + $0x1c] sm:$0xf]
    %v190 = vld [vmem:[%s3 + $0x20] sm:$0xf]
    %v191 = vld [vmem:[%s3 + $0x24] sm:$0xf]
    %v192 = vld [vmem:[%s3 + $0x28] sm:$0xf]
    %v193 = vld [vmem:[%s3 + $0x2c] sm:$0xf]
    %v194 = vld [vmem:[%s3 + $0x30] sm:$0xf]
    %v195 = vld [vmem:[%s3 + $0x34] sm:$0xf]
    %v196 = vld [vmem:[%s3 + $0x38] sm:$0xf]
    %v197 = vld [vmem:[%s3 + $0x3c] sm:$0xf]
    %v198 = vld [vmem:[%s1] sm:$0xf]
    %v199 = vld [vmem:[%s1 + $0x4] sm:$0xf]
    %v200 = vld [vmem:[%s1 + $0x8] sm:$0xf]
    %v201 = vld [vmem:[%s1 + $0xc] sm:$0xf]
    %v202 = vld [vmem:[%s1 + $0x10] sm:$0x1]
    %v219 = vunpack.c.l.b16 %v182
    %v220 = vunpack.c.l.b16 %v183
    %v221 = vunpack.c.l.b16 %v184
    %v222 = vunpack.c.l.b16 %v185
    %v223 = vunpack.c.l.b16 %v186
    %v224 = vunpack.c.l.b16 %v187
    %v225 = vunpack.c.l.b16 %v188
    %v226 = vunpack.c.l.b16 %v189
    %v227 = vunpack.c.l.b16 %v190
    %v228 = vunpack.c.l.b16 %v191
    %v229 = vunpack.c.l.b16 %v192
    %v230 = vunpack.c.l.b16 %v193
    %v231 = vunpack.c.l.b16 %v194
    %v232 = vunpack.c.l.b16 %v195
    %v233 = vunpack.c.l.b16 %v196
    %v234 = vunpack.c.l.b16 %v197
    %v235 = vpack.c.b16 %v220, %v219
    %v236 = vpack.c.b16 %v222, %v221
    %v237 = vpack.c.b16 %v224, %v223
    %v238 = vpack.c.b16 %v226, %v225
    %v239 = vpack.c.b16 %v228, %v227
    %v240 = vpack.c.b16 %v230, %v229
    %v241 = vpack.c.b16 %v232, %v231
    %v242 = vpack.c.b16 %v234, %v233
    %v248 = vunpack.c.l.b16 %v198
    %v249 = vunpack.c.l.b16 %v199
    %v250 = vunpack.c.l.b16 %v200
    %v251 = vunpack.c.l.b16 %v201
    %v252 = vunpack.c.l.b16 %v202
    %v253 = vpack.c.b16 %v249, %v248
    %v254 = vpack.c.b16 %v251, %v250
    %v255 = vpack.c.b16 %v252, %v252
    %v259 = vsel %vm102, %v235, 0
    %v262 = vsel %vm102, %v236, 0
    %v265 = vsel %vm102, %v237, 0
    %v268 = vsel %vm102, %v238, 0
    %v271 = vsel %vm102, %v239, 0
    %v274 = vsel %vm102, %v240, 0
    %v277 = vsel %vm102, %v241, 0
    %v280 = vsel %vm102, %v242, 0
    %v283 = vand.u32 %v255, %v129
    %285 = vmatpush.bf16.msra.mxu0 0
    %286 = vmatpush.bf16.msra.mxu0 0
    %287 = vmatpush.bf16.msra.mxu0 0
    %288 = vmatpush.bf16.msra.mxu0 0
    %289 = vmatpush.bf16.msra.mxu0 0
    %290 = vmatpush.bf16.msra.mxu0 %v283
    %291 = vmatpush.bf16.msra.mxu0 %v254
    %292 = vmatpush.bf16.msra.mxu0 %v253
    %293 = vmatmul.bf16.gmra.mxu0 %v259
    %v294 = vpop.f32.mrf.mxu0
    %v295 = vadd.f32 0.0, %v294
    %v296 = vpop.f32.mrf.mxu0
    %v297 = vadd.f32 0.0, %v296
    %298 = vmatmul.bf16.gmra.mxu0 %v262
    %v299 = vpop.f32.mrf.mxu0
    %v300 = vadd.f32 0.0, %v299
    %v301 = vpop.f32.mrf.mxu0
    %v302 = vadd.f32 0.0, %v301
    %303 = vmatmul.bf16.gmra.mxu0 %v265
    %v304 = vpop.f32.mrf.mxu0
    %v305 = vadd.f32 0.0, %v304
    %v306 = vpop.f32.mrf.mxu0
    %v307 = vadd.f32 0.0, %v306
    %308 = vmatmul.bf16.gmra.mxu0 %v268
    %v309 = vpop.f32.mrf.mxu0
    %v310 = vadd.f32 0.0, %v309
    %v311 = vpop.f32.mrf.mxu0
    %v312 = vadd.f32 0.0, %v311
    %313 = vmatmul.bf16.gmra.mxu0 %v271
    %v314 = vpop.f32.mrf.mxu0
    %v315 = vadd.f32 0.0, %v314
    %v316 = vpop.f32.mrf.mxu0
    %v317 = vadd.f32 0.0, %v316
    %318 = vmatmul.bf16.gmra.mxu0 %v274
    %v319 = vpop.f32.mrf.mxu0
    %v320 = vadd.f32 0.0, %v319
    %v321 = vpop.f32.mrf.mxu0
    %v322 = vadd.f32 0.0, %v321
    %323 = vmatmul.bf16.gmra.mxu0 %v277
    %v324 = vpop.f32.mrf.mxu0
    %v325 = vadd.f32 0.0, %v324
    %v326 = vpop.f32.mrf.mxu0
    %v327 = vadd.f32 0.0, %v326
    %328 = vmatmul.bf16.gmra.mxu0 %v280
    %v329 = vpop.f32.mrf.mxu0
    %v330 = vadd.f32 0.0, %v329
    %v331 = vpop.f32.mrf.mxu0
    %v332 = vadd.f32 0.0, %v331
    %333 = vdwg.mxu0
    %v334 = vmax.f32 %v143, 0.0
    %v335 = vmax.f32 %v145, 0.0
    %v336 = vmax.f32 %v148, 0.0
    %v337 = vmax.f32 %v150, 0.0
    %v338 = vmax.f32 %v153, 0.0
    %v339 = vmax.f32 %v155, 0.0
    %v340 = vmax.f32 %v158, 0.0
    %v341 = vmax.f32 %v160, 0.0
    %v342 = vmax.f32 %v163, 0.0
    %v343 = vmax.f32 %v165, 0.0
    %v344 = vmax.f32 %v168, 0.0
    %v345 = vmax.f32 %v170, 0.0
    %v346 = vmax.f32 %v173, 0.0
    %v347 = vmax.f32 %v175, 0.0
    %v348 = vmax.f32 %v178, 0.0
    %v349 = vmax.f32 %v180, 0.0
    %v350 = vmax.f32 %v295, 0.0
    %v351 = vmax.f32 %v297, 0.0
    %v352 = vmax.f32 %v300, 0.0
    %v353 = vmax.f32 %v302, 0.0
    %v354 = vmax.f32 %v305, 0.0
    %v355 = vmax.f32 %v307, 0.0
    %v356 = vmax.f32 %v310, 0.0
    %v357 = vmax.f32 %v312, 0.0
    %v358 = vmax.f32 %v315, 0.0
    %v359 = vmax.f32 %v317, 0.0
    %v360 = vmax.f32 %v320, 0.0
    %v361 = vmax.f32 %v322, 0.0
    %v362 = vmax.f32 %v325, 0.0
    %v363 = vmax.f32 %v327, 0.0
    %v364 = vmax.f32 %v330, 0.0
    %v365 = vmax.f32 %v332, 0.0
    %v366 = vld [vmem:[%s4] sm:$0xff]
    %v367 = vld [vmem:[%s4 + $0x8] sm:$0xff]
    %v368 = vld [vmem:[%s4 + $0x10] sm:$0xff]
    %v369 = vld [vmem:[%s4 + $0x18] sm:$0xff]
    %v370 = vld [vmem:[%s4 + $0x20] sm:$0xff]
    %v371 = vld [vmem:[%s4 + $0x28] sm:$0xff]
    %v372 = vld [vmem:[%s4 + $0x30] sm:$0xff]
    %v373 = vld [vmem:[%s4 + $0x38] sm:$0xff]
    %v374 = vld [vmem:[%s4 + $0x40] sm:$0xff]
    %v375 = vld [vmem:[%s4 + $0x48] sm:$0xff]
    %v376 = vld [vmem:[%s4 + $0x50] sm:$0xff]
    %v377 = vld [vmem:[%s4 + $0x58] sm:$0xff]
    %v378 = vld [vmem:[%s4 + $0x60] sm:$0xff]
    %v379 = vld [vmem:[%s4 + $0x68] sm:$0xff]
    %v380 = vld [vmem:[%s4 + $0x70] sm:$0xff]
    %v381 = vld [vmem:[%s4 + $0x78] sm:$0xff]
    %383 = vset.pattern.permute.xlu0 0
    %384 = vperm.xlu0 %383, %v366
    %v385 = vpop.permute.xlu0 %384
    %388 = vset.pattern.permute.xlu0 0
    %389 = vperm.xlu0 %388, %v367
    %v390 = vpop.permute.xlu0 %389
    %393 = vset.pattern.permute.xlu0 0
    %394 = vperm.xlu0 %393, %v368
    %v395 = vpop.permute.xlu0 %394
    %398 = vset.pattern.permute.xlu0 0
    %399 = vperm.xlu0 %398, %v369
    %v400 = vpop.permute.xlu0 %399
    %403 = vset.pattern.permute.xlu0 0
    %404 = vperm.xlu0 %403, %v370
    %v405 = vpop.permute.xlu0 %404
    %408 = vset.pattern.permute.xlu0 0
    %409 = vperm.xlu0 %408, %v371
    %v410 = vpop.permute.xlu0 %409
    %413 = vset.pattern.permute.xlu0 0
    %414 = vperm.xlu0 %413, %v372
    %v415 = vpop.permute.xlu0 %414
    %418 = vset.pattern.permute.xlu0 0
    %419 = vperm.xlu0 %418, %v373
    %v420 = vpop.permute.xlu0 %419
    %423 = vset.pattern.permute.xlu0 0
    %424 = vperm.xlu0 %423, %v374
    %v425 = vpop.permute.xlu0 %424
    %428 = vset.pattern.permute.xlu0 0
    %429 = vperm.xlu0 %428, %v375
    %v430 = vpop.permute.xlu0 %429
    %433 = vset.pattern.permute.xlu0 0
    %434 = vperm.xlu0 %433, %v376
    %v435 = vpop.permute.xlu0 %434
    %438 = vset.pattern.permute.xlu0 0
    %439 = vperm.xlu0 %438, %v377
    %v440 = vpop.permute.xlu0 %439
    %443 = vset.pattern.permute.xlu0 0
    %444 = vperm.xlu0 %443, %v378
    %v445 = vpop.permute.xlu0 %444
    %448 = vset.pattern.permute.xlu0 0
    %449 = vperm.xlu0 %448, %v379
    %v450 = vpop.permute.xlu0 %449
    %453 = vset.pattern.permute.xlu0 0
    %454 = vperm.xlu0 %453, %v380
    %v455 = vpop.permute.xlu0 %454
    %458 = vset.pattern.permute.xlu0 0
    %459 = vperm.xlu0 %458, %v381
    %v460 = vpop.permute.xlu0 %459
    %v462 = vmul.f32 %v334, %v385
    %v463 = vmul.f32 %v335, %v390
    %v464 = vmul.f32 %v336, %v395
    %v465 = vmul.f32 %v337, %v400
    %v466 = vmul.f32 %v338, %v405
    %v467 = vmul.f32 %v339, %v410
    %v468 = vmul.f32 %v340, %v415
    %v469 = vmul.f32 %v341, %v420
    %v470 = vmul.f32 %v342, %v425
    %v471 = vmul.f32 %v343, %v430
    %v472 = vmul.f32 %v344, %v435
    %v473 = vmul.f32 %v345, %v440
    %v474 = vmul.f32 %v346, %v445
    %v475 = vmul.f32 %v347, %v450
    %v476 = vmul.f32 %v348, %v455
    %v477 = vmul.f32 %v349, %v460
    %v478 = vadd.f32 %v462, %v463
    %v479 = vadd.f32 %v478, %v464
    %v480 = vadd.f32 %v479, %v465
    %v481 = vadd.f32 %v480, %v466
    %v482 = vadd.f32 %v481, %v467
    %v483 = vadd.f32 %v482, %v468
    %v484 = vadd.f32 %v483, %v469
    %v485 = vadd.f32 %v484, %v470
    %v486 = vadd.f32 %v485, %v471
    %v487 = vadd.f32 %v486, %v472
    %v488 = vadd.f32 %v487, %v473
    %v489 = vadd.f32 %v488, %v474
    %v490 = vadd.f32 %v489, %v475
    %v491 = vadd.f32 %v490, %v476
    %v492 = vadd.f32 %v491, %v477
    %v493 = vrot.slane %v492, 4
    %v494 = vadd.f32 %v492, %v493
    %v495 = vrot.slane %v494, 2
    %v496 = vadd.f32 %v494, %v495
    %v497 = vrot.slane %v496, 1
    %v498 = vadd.f32 %v496, %v497
    %v499 = vld [vmem:[%s4 + $0x80] sm:$0xff]
    %v500 = vld [vmem:[%s4 + $0x88] sm:$0xff]
    %v501 = vld [vmem:[%s4 + $0x90] sm:$0xff]
    %v502 = vld [vmem:[%s4 + $0x98] sm:$0xff]
    %v503 = vld [vmem:[%s4 + $0xa0] sm:$0xff]
    %v504 = vld [vmem:[%s4 + $0xa8] sm:$0xff]
    %v505 = vld [vmem:[%s4 + $0xb0] sm:$0xff]
    %v506 = vld [vmem:[%s4 + $0xb8] sm:$0xff]
    %v507 = vld [vmem:[%s4 + $0xc0] sm:$0xff]
    %v508 = vld [vmem:[%s4 + $0xc8] sm:$0xff]
    %v509 = vld [vmem:[%s4 + $0xd0] sm:$0xff]
    %v510 = vld [vmem:[%s4 + $0xd8] sm:$0xff]
    %v511 = vld [vmem:[%s4 + $0xe0] sm:$0xff]
    %v512 = vld [vmem:[%s4 + $0xe8] sm:$0xff]
    %v513 = vld [vmem:[%s4 + $0xf0] sm:$0xff]
    %v514 = vld [vmem:[%s4 + $0xf8] sm:$0xff]
    %516 = vset.pattern.permute.xlu0 0
    %517 = vperm.xlu0 %516, %v499
    %v518 = vpop.permute.xlu0 %517
    %521 = vset.pattern.permute.xlu0 0
    %522 = vperm.xlu0 %521, %v500
    %v523 = vpop.permute.xlu0 %522
    %526 = vset.pattern.permute.xlu0 0
    %527 = vperm.xlu0 %526, %v501
    %v528 = vpop.permute.xlu0 %527
    %531 = vset.pattern.permute.xlu0 0
    %532 = vperm.xlu0 %531, %v502
    %v533 = vpop.permute.xlu0 %532
    %536 = vset.pattern.permute.xlu0 0
    %537 = vperm.xlu0 %536, %v503
    %v538 = vpop.permute.xlu0 %537
    %541 = vset.pattern.permute.xlu0 0
    %542 = vperm.xlu0 %541, %v504
    %v543 = vpop.permute.xlu0 %542
    %546 = vset.pattern.permute.xlu0 0
    %547 = vperm.xlu0 %546, %v505
    %v548 = vpop.permute.xlu0 %547
    %551 = vset.pattern.permute.xlu0 0
    %552 = vperm.xlu0 %551, %v506
    %v553 = vpop.permute.xlu0 %552
    %556 = vset.pattern.permute.xlu0 0
    %557 = vperm.xlu0 %556, %v507
    %v558 = vpop.permute.xlu0 %557
    %561 = vset.pattern.permute.xlu0 0
    %562 = vperm.xlu0 %561, %v508
    %v563 = vpop.permute.xlu0 %562
    %566 = vset.pattern.permute.xlu0 0
    %567 = vperm.xlu0 %566, %v509
    %v568 = vpop.permute.xlu0 %567
    %571 = vset.pattern.permute.xlu0 0
    %572 = vperm.xlu0 %571, %v510
    %v573 = vpop.permute.xlu0 %572
    %576 = vset.pattern.permute.xlu0 0
    %577 = vperm.xlu0 %576, %v511
    %v578 = vpop.permute.xlu0 %577
    %581 = vset.pattern.permute.xlu0 0
    %582 = vperm.xlu0 %581, %v512
    %v583 = vpop.permute.xlu0 %582
    %586 = vset.pattern.permute.xlu0 0
    %587 = vperm.xlu0 %586, %v513
    %v588 = vpop.permute.xlu0 %587
    %591 = vset.pattern.permute.xlu0 0
    %592 = vperm.xlu0 %591, %v514
    %v593 = vpop.permute.xlu0 %592
    %v595 = vmul.f32 %v350, %v518
    %v596 = vmul.f32 %v351, %v523
    %v597 = vmul.f32 %v352, %v528
    %v598 = vmul.f32 %v353, %v533
    %v599 = vmul.f32 %v354, %v538
    %v600 = vmul.f32 %v355, %v543
    %v601 = vmul.f32 %v356, %v548
    %v602 = vmul.f32 %v357, %v553
    %v603 = vmul.f32 %v358, %v558
    %v604 = vmul.f32 %v359, %v563
    %v605 = vmul.f32 %v360, %v568
    %v606 = vmul.f32 %v361, %v573
    %v607 = vmul.f32 %v362, %v578
    %v608 = vmul.f32 %v363, %v583
    %v609 = vmul.f32 %v364, %v588
    %v610 = vmul.f32 %v365, %v593
    %v611 = vadd.f32 %v595, %v596
    %v612 = vadd.f32 %v611, %v597
    %v613 = vadd.f32 %v612, %v598
    %v614 = vadd.f32 %v613, %v599
    %v615 = vadd.f32 %v614, %v600
    %v616 = vadd.f32 %v615, %v601
    %v617 = vadd.f32 %v616, %v602
    %v618 = vadd.f32 %v617, %v603
    %v619 = vadd.f32 %v618, %v604
    %v620 = vadd.f32 %v619, %v605
    %v621 = vadd.f32 %v620, %v606
    %v622 = vadd.f32 %v621, %v607
    %v623 = vadd.f32 %v622, %v608
    %v624 = vadd.f32 %v623, %v609
    %v625 = vadd.f32 %v624, %v610
    %v626 = vrot.slane %v625, 4
    %v627 = vadd.f32 %v625, %v626
    %v628 = vrot.slane %v627, 2
    %v629 = vadd.f32 %v627, %v628
    %v630 = vrot.slane %v629, 1
    %v631 = vadd.f32 %v629, %v630
    %v632 = vadd.f32 %v498, %v631
    %s633 = sld [smem:[#allocation2]]
    %v634 = vstv %s633
    %v635 = vadd.f32 %v632, %v634
    %636 = vst [vmem:[#allocation3] sm:$0x1] %v635
    // Predicated region
    $region26: #{tpu_custom_call.1} parent=1 // pred_check
      _
    $region27: #{tpu_custom_call.1} parent=1 // pred_check_branch
      %638 = sbr.rel (0) target = $region29
    $region28: #{tpu_custom_call.1} parent=1 // pred_region
      %640 = vsyncadd [#allocation4], 0
      %s642 = sshll.u32 [#allocation3], 4
      %s643 = int_to_ptr.vmem [resolvable:$true] %s642
      %s644 = sshll.u32 %s6, 4
      %s645 = int_to_ptr.hbm [resolvable:$true] %s644
      %647 = dma.vmem_to_hbm [thread:$0]  %s643, 16, %s645, [#allocation4]
    $region29: #{tpu_custom_call.1} parent=1 // pred_fallthru
      _
    // Predicated region
    $region30: #{tpu_custom_call.1} parent=1 // pred_check
      _
    $region31: #{tpu_custom_call.1} parent=1 // pred_check_branch
      %649 = sbr.rel (0) target = $region33
    $region32: #{tpu_custom_call.1} parent=1 // pred_region
      %651 = dma.done [#allocation4], 16
    $region33: #{tpu_custom_call.1} parent=1 // pred_fallthru
      _
    %652 = vsyncpa [#allocation4], 1

</llo_original>
